<compile_context>
chip_gen: v7x
topology: tpu7x:2x2x1
jax: 0.10.0
libtpu: 0.0.40
codegen_flags: <defaults>
</compile_context>

<pallas_src>
import jax
import jax.numpy as jnp
from jax.experimental import pallas as pl
from jax.experimental.pallas import tpu as pltpu

_HIDDEN = 128


def _mlp_kernel(x_ref, w1_ref, b1_ref, w2_ref, b2_ref, o_ref):
    # In-kernel operand cast: x arrives in its native dtype (f32); cast to the
    # MXU compute dtype here so HBM only ever sees one pass over x.
    x = x_ref[...].astype(w1_ref.dtype)
    # fc1: (bb, L) @ (L, 128) on the MXU, bf16 operands, f32 accumulation.
    h = jnp.dot(x, w1_ref[...], preferred_element_type=jnp.float32)
    h = jnp.maximum(h + b1_ref[...], 0.0)            # bias/ReLU in f32 (VPU)
    # fc2: (bb, 128) @ (128, 128), bf16 operands -> f32 accumulate.
    y = jnp.dot(h.astype(w2_ref.dtype), w2_ref[...],
                preferred_element_type=jnp.float32)
    y = jnp.maximum(y + b2_ref[...], 0.0)
    o_ref[...] = y.astype(o_ref.dtype)


def prepare_params(w1, b1, w2, b2, *, compute_dtype=jnp.bfloat16):
    """One-time parameter prep (do this at load time, not per forward call).

    w1: (128, L), b1: (128,), w2: (128, 128), b2: (128,)  -- PyTorch layout.
    Returns (w1_t, b1_2d, w2_t, b2_2d) with weights transposed to (in, out)
    and cast to the MXU compute dtype; biases kept in f32 as (1, 128).
    Pass compute_dtype=jnp.float32 for a full-f32 operand path.
    """
    w1_t = jnp.asarray(w1).T.astype(compute_dtype)        # (L, 128)
    w2_t = jnp.asarray(w2).T.astype(compute_dtype)        # (128, 128)
    b1_2d = jnp.asarray(b1, jnp.float32).reshape(1, -1)    # (1, 128)
    b2_2d = jnp.asarray(b2, jnp.float32).reshape(1, -1)    # (1, 128)
    return w1_t, b1_2d, w2_t, b2_2d


def _round_up(n, m):
    return ((n + m - 1) // m) * m


def _cores_per_chip():
    """2 TensorCores per chip on v7x; 1 on v5e/v6e (and anything unknown)."""
    try:
        kind = jax.devices()[0].device_kind.lower()
    except Exception:
        return 1
    return 2 if "v7" in kind else 1


def _default_block_b(B, *, num_cores=1):
    B = max(B, 1)
    if B <= 16:
        # Tiny batch: one block that exactly covers the (8-padded) batch.
        return _round_up(B, 8)
    if num_cores > 1:
        # v7x: give every TensorCore at least one grid step (even step count
        # for 2 TCs), MXU-aligned (256) once the per-core share is large.
        per_core = (B + num_cores - 1) // num_cores
        step = 256 if per_core > 256 else 16
        return min(1024, _round_up(per_core, step))
    if B <= 1024:
        # Single grid step: amortizes the ~0.35us/step overhead completely;
        # a 1024x(16+128) f32-in / bf16-out working set is ~3 MiB -- far under
        # every chip's scoped-VMEM default.
        return _round_up(B, 16)
    return 1024                                    # multiple of 256, MXU aligned


def label_set_encoder(x, w1_t, b1_2d, w2_t, b2_2d, *, block_b=None,
                      out_dtype=jnp.bfloat16, dim_semantics=None):
    """x: (B, L) in its native dtype (f32 ok). Prepared params from
    prepare_params(). Returns (B, 128) in out_dtype.

    Default out_dtype is bf16 (writeback dominates HBM traffic for small L;
    introduces ~2^-8 relative error in the ReLU activations). Pass
    out_dtype=jnp.float32 to match the PyTorch reference dtype exactly.
    """
    B, L = x.shape
    H = w1_t.shape[1]
    assert w1_t.shape == (L, H) and w2_t.shape == (H, H)
    assert b1_2d.shape == (1, H) and b2_2d.shape == (1, H)

    num_cores = _cores_per_chip()
    if block_b is None:
        block_b = _default_block_b(B, num_cores=num_cores)
    # Multiples of 16 are preferred for bf16 sublane packing; 8 is the hard
    # floor (f32 sublane).
    assert block_b % 8 == 0, "block_b must be a multiple of 8 (prefer 16)"
    grid = (pl.cdiv(B, block_b),)       # ragged batches OK (tail is padded)

    if dim_semantics is None:
        # Plain "parallel" does NOT shard across v7x's two TensorCores;
        # CORE_PARALLEL does. v5e/v6e (single TC) keep the plain path.
        dim_semantics = ((pltpu.CORE_PARALLEL,) if num_cores > 1
                         else ("parallel",))

    # Weights/biases: constant index_map -> single-buffered, resident in VMEM.
    resident = dict(pipeline_mode=pl.Buffered(1))

    return pl.pallas_call(
        _mlp_kernel,
        out_shape=jax.ShapeDtypeStruct((B, H), out_dtype),
        grid_spec=pltpu.PrefetchScalarGridSpec(
            num_scalar_prefetch=0,
            grid=grid,
            in_specs=[
                pl.BlockSpec((block_b, L), lambda i: (i, 0)),          # x tile
                pl.BlockSpec((L, H), lambda i: (0, 0), **resident),    # W1
                pl.BlockSpec((1, H), lambda i: (0, 0), **resident),    # b1
                pl.BlockSpec((H, H), lambda i: (0, 0), **resident),    # W2
                pl.BlockSpec((1, H), lambda i: (0, 0), **resident),    # b2
            ],
            out_specs=pl.BlockSpec((block_b, H), lambda i: (i, 0)),
        ),
        compiler_params=pltpu.CompilerParams(
            dimension_semantics=dim_semantics),
    )(x, w1_t, b1_2d, w2_t, b2_2d)


def _init_params(key, number_labels, hidden=_HIDDEN):
    # Deterministic synthetic init (PyTorch-like uniform fan-in bounds).
    k1, k2, k3, k4 = jax.random.split(key, 4)
    bound1 = 1.0 / jnp.sqrt(number_labels)
    bound2 = 1.0 / jnp.sqrt(hidden)
    w1 = jax.random.uniform(k1, (hidden, number_labels), jnp.float32,
                            -bound1, bound1)
    b1 = jax.random.uniform(k2, (hidden,), jnp.float32, -bound1, bound1)
    w2 = jax.random.uniform(k3, (hidden, hidden), jnp.float32,
                            -bound2, bound2)
    b2 = jax.random.uniform(k4, (hidden,), jnp.float32, -bound2, bound2)
    return w1, b1, w2, b2


def _ref_forward(x, w1, b1, w2, b2, cast=None):
    """Pure-JAX reference matching the PyTorch forward. Optional operand cast
    emulates bf16 MXU inputs with f32 accumulation."""
    if cast is not None:
        x = x.astype(cast).astype(jnp.float32)
        w1 = w1.astype(cast).astype(jnp.float32)
        w2 = w2.astype(cast).astype(jnp.float32)
    h = jnp.maximum(x @ w1.T + b1, 0.0)
    return jnp.maximum(h @ w2.T + b2, 0.0)


if __name__ == "__main__":
    number_labels = 16
    batch = 8

    key = jax.random.PRNGKey(0)
    kx, kp, kx2 = jax.random.split(key, 3)
    x = jax.random.normal(kx, (batch, number_labels), jnp.float32)
    w1, b1, w2, b2 = _init_params(kp, number_labels)

    # One-time parameter prep (transpose / reshape / bf16 cast).
    params = prepare_params(w1, b1, w2, b2, compute_dtype=jnp.bfloat16)

    ref_f32 = _ref_forward(x, w1, b1, w2, b2)
    ref_bf16 = _ref_forward(x, w1, b1, w2, b2, cast=jnp.bfloat16)

    # --- default path: bf16 output (halves writeback traffic) ---
    out = jax.block_until_ready(label_set_encoder(x, *params))
    assert out.shape == (batch, _HIDDEN) and out.dtype == jnp.bfloat16
    out_f = out.astype(jnp.float32)
    assert jnp.allclose(out_f, ref_bf16, atol=3e-2, rtol=3e-2)
    assert jnp.allclose(out_f, ref_f32, atol=6e-2, rtol=6e-2)

    # --- f32 output path: tight vs bf16-emulated reference ---
    out32 = jax.block_until_ready(
        label_set_encoder(x, *params, out_dtype=jnp.float32))
    assert out32.dtype == jnp.float32
    assert jnp.allclose(out32, ref_bf16, atol=2e-3, rtol=2e-3)
    assert jnp.allclose(out32, ref_f32, atol=5e-2, rtol=5e-2)

    # --- larger ragged batch with an explicit block size: exercises the cdiv
    #     grid (3 steps), padded tail block, and multi-step batch axis. ---
    big_b = 520
    x_big = jax.random.normal(kx2, (big_b, number_labels), jnp.float32)
    ref_big = _ref_forward(x_big, w1, b1, w2, b2, cast=jnp.bfloat16)

    out_big = jax.block_until_ready(
        label_set_encoder(x_big, *params, block_b=256))
    assert out_big.shape == (big_b, _HIDDEN)
    assert jnp.allclose(out_big.astype(jnp.float32), ref_big,
                        atol=3e-2, rtol=3e-2)

    # --- same batch through the default block-size selection (one big block
    #     on single-TC chips, two steps on v7x). ---
    out_big2 = jax.block_until_ready(label_set_encoder(x_big, *params))
    assert out_big2.shape == (big_b, _HIDDEN)
    assert jnp.allclose(out_big2.astype(jnp.float32), ref_big,
                        atol=3e-2, rtol=3e-2)

    print("KERNEL_OK")
</pallas_src>

<mosaic_0001>
module attributes {stable_mosaic.version = 11 : i64} {
  func.func @_mlp_kernel(%arg0: i32, %arg1: memref<8x16xf32, #tpu.memory_space<vmem>>, %arg2: memref<16x128xbf16, #tpu.memory_space<vmem>>, %arg3: memref<1x128xf32, #tpu.memory_space<vmem>>, %arg4: memref<128x128xbf16, #tpu.memory_space<vmem>>, %arg5: memref<1x128xf32, #tpu.memory_space<vmem>>, %arg6: memref<8x128xbf16, #tpu.memory_space<vmem>>) attributes {dimension_semantics = [#tpu.dimension_semantics<parallel>], iteration_bounds = array<i64: 1>, scalar_prefetch = 0 : i64, scratch_operands = 0 : i64, tpu.core_type = #tpu.core_type<tc>, window_params = [{transform_indices = @transform_0, window_bounds = array<i64: 8, 16>}, {pipeline_mode = #tpu.pipeline_mode<synchronous>, transform_indices = @transform_1, window_bounds = array<i64: 16, 128>}, {pipeline_mode = #tpu.pipeline_mode<synchronous>, transform_indices = @transform_2, window_bounds = array<i64: 1, 128>}, {pipeline_mode = #tpu.pipeline_mode<synchronous>, transform_indices = @transform_3, window_bounds = array<i64: 128, 128>}, {pipeline_mode = #tpu.pipeline_mode<synchronous>, transform_indices = @transform_4, window_bounds = array<i64: 1, 128>}, {transform_indices = @transform_5, window_bounds = array<i64: 8, 128>}]} {
    %c0 = arith.constant 0 : index
    %c0_0 = arith.constant 0 : index
    %0 = vector.load %arg1[%c0, %c0_0] : memref<8x16xf32, #tpu.memory_space<vmem>>, vector<8x16xf32>
    %1 = arith.truncf %0 : vector<8x16xf32> to vector<8x16xbf16>
    %c0_1 = arith.constant 0 : index
    %c0_2 = arith.constant 0 : index
    %2 = vector.load %arg2[%c0_1, %c0_2] : memref<16x128xbf16, #tpu.memory_space<vmem>>, vector<16x128xbf16>
    %cst = arith.constant dense<0.000000e+00> : vector<8x128xf32>
    %3 = tpu.matmul %1, %2, %cst {dimension_numbers = #tpu.dot_dimension_numbers<[1], [0], [0], [1], [0, 0, 1, 1], [], []>} : vector<8x16xbf16>, vector<16x128xbf16>, vector<8x128xf32> -> vector<8x128xf32>
    %c0_3 = arith.constant 0 : index
    %c0_4 = arith.constant 0 : index
    %4 = vector.load %arg3[%c0_3, %c0_4] : memref<1x128xf32, #tpu.memory_space<vmem>>, vector<1x128xf32>
    %5 = vector.broadcast %4 : vector<1x128xf32> to vector<8x128xf32>
    %6 = arith.addf %3, %5 : vector<8x128xf32>
    %cst_5 = arith.constant 0.000000e+00 : f32
    %7 = vector.broadcast %cst_5 : f32 to vector<8x128xf32>
    %8 = arith.maximumf %6, %7 : vector<8x128xf32>
    %9 = arith.truncf %8 : vector<8x128xf32> to vector<8x128xbf16>
    %c0_6 = arith.constant 0 : index
    %c0_7 = arith.constant 0 : index
    %10 = vector.load %arg4[%c0_6, %c0_7] : memref<128x128xbf16, #tpu.memory_space<vmem>>, vector<128x128xbf16>
    %cst_8 = arith.constant dense<0.000000e+00> : vector<8x128xf32>
    %11 = tpu.matmul %9, %10, %cst_8 {dimension_numbers = #tpu.dot_dimension_numbers<[1], [0], [0], [1], [0, 0, 1, 1], [], []>} : vector<8x128xbf16>, vector<128x128xbf16>, vector<8x128xf32> -> vector<8x128xf32>
    %c0_9 = arith.constant 0 : index
    %c0_10 = arith.constant 0 : index
    %12 = vector.load %arg5[%c0_9, %c0_10] : memref<1x128xf32, #tpu.memory_space<vmem>>, vector<1x128xf32>
    %13 = vector.broadcast %12 : vector<1x128xf32> to vector<8x128xf32>
    %14 = arith.addf %11, %13 : vector<8x128xf32>
    %cst_11 = arith.constant 0.000000e+00 : f32
    %15 = vector.broadcast %cst_11 : f32 to vector<8x128xf32>
    %16 = arith.maximumf %14, %15 : vector<8x128xf32>
    %17 = arith.truncf %16 : vector<8x128xf32> to vector<8x128xbf16>
    %c0_12 = arith.constant 0 : index
    %c0_13 = arith.constant 0 : index
    %18 = vector.load %arg6[%c0_12, %c0_13] : memref<8x128xbf16, #tpu.memory_space<vmem>>, vector<8x128xbf16>
    tpu.vector_store %arg6[%c0_12, %c0_13], %17 {strides = array<i32>} : memref<8x128xbf16, #tpu.memory_space<vmem>>, vector<8x128xbf16>,
    return
  }
  func.func @transform_0(%arg0: i32) -> (i32, i32) {
    %c0_i32 = arith.constant 0 : i32
    %c0_i32_0 = arith.constant 0 : i32
    return %arg0, %c0_i32 : i32, i32
  }
  func.func @transform_1(%arg0: i32) -> (i32, i32) {
    %c0_i32 = arith.constant 0 : i32
    %c0_i32_0 = arith.constant 0 : i32
    %c0_i32_1 = arith.constant 0 : i32
    return %c0_i32, %c0_i32_0 : i32, i32
  }
  func.func @transform_2(%arg0: i32) -> (i32, i32) {
    %c0_i32 = arith.constant 0 : i32
    %c0_i32_0 = arith.constant 0 : i32
    %c0_i32_1 = arith.constant 0 : i32
    return %c0_i32, %c0_i32_0 : i32, i32
  }
  func.func @transform_3(%arg0: i32) -> (i32, i32) {
    %c0_i32 = arith.constant 0 : i32
    %c0_i32_0 = arith.constant 0 : i32
    %c0_i32_1 = arith.constant 0 : i32
    return %c0_i32, %c0_i32_0 : i32, i32
  }
  func.func @transform_4(%arg0: i32) -> (i32, i32) {
    %c0_i32 = arith.constant 0 : i32
    %c0_i32_0 = arith.constant 0 : i32
    %c0_i32_1 = arith.constant 0 : i32
    return %c0_i32, %c0_i32_0 : i32, i32
  }
  func.func @transform_5(%arg0: i32) -> (i32, i32) {
    %c0_i32 = arith.constant 0 : i32
    %c0_i32_0 = arith.constant 0 : i32
    return %arg0, %c0_i32 : i32, i32
  }
}

</mosaic_0001>

<llo_original>
// kernel: tpu_custom_call.1
$region0: #{tpu_custom_call.1}
  #allocation0 [shape = 'u32[]', space=smem, size = 0x4, offset = 0x4, fixed_abs, tag = 'smem constant byte address 0x4 - core index']
  #allocation1 [shape = 'u32[144,128]{1,0:T(1,128)}', space=vmem, size = 0x12000, scoped, tag = 'internal scratch']
  %s0 = inlined_call_operand.hbm [shape: f32[8,16], index: 0, kind: input, shape index: {}]
  %s1 = inlined_call_operand.hbm [shape: bf16[16,128], index: 1, kind: input, shape index: {}]
  %s2 = inlined_call_operand.vmem [shape: f32[1,128], index: 2, kind: input, shape index: {}]
  %s3 = inlined_call_operand.hbm [shape: bf16[128,128], index: 3, kind: input, shape index: {}]
  %s4 = inlined_call_operand.vmem [shape: f32[1,128], index: 4, kind: input, shape index: {}]
  %s5 = inlined_call_operand.hbm [shape: bf16[8,128], index: 5, kind: output, shape index: {}]
  %s6 = sld [smem:[#allocation0]]
  $region42: #{tpu_custom_call.1} parent=0
    _
  %s8 = ssub.s32 1, %s6
  %s9 = scalar_select 0, %s8, %s6
  $region1: #{tpu_custom_call.1} parent=0
    #allocation2 [shape = 'u8[4096]{0}', space=vmem, size = 0x1000, scoped, tag = 'input window, operand 0, single buffered']
    #allocation3 [shape = 's32[1]{0}', space=sflag, size = 0x4, scoped, tag = 'scoped memory for tpu_custom_call.1']
    #allocation4 [shape = 's32[1]{0}', space=sflag, size = 0x4, scoped, tag = 'scoped memory for tpu_custom_call.1']
    #allocation5 [shape = 'u8[4096]{0}', space=vmem, size = 0x1000, scoped, tag = 'input window, operand 1, single buffered']
    #allocation6 [shape = 's32[1]{0}', space=sflag, size = 0x4, scoped, tag = 'scoped memory for tpu_custom_call.1']
    #allocation7 [shape = 'u8[32768]{0}', space=vmem, size = 0x8000, scoped, tag = 'input window, operand 3, single buffered']
    #allocation8 [shape = 'u8[2048]{0}', space=vmem, size = 0x800, scoped, tag = 'output window, operand 0, single buffered']
    %10 = vsyncpa [#allocation3], 0
    %11 = vsyncpa [#allocation6], 0
    %12 = vsyncpa [#allocation4], 0
    // Predicated region
    $region2: #{tpu_custom_call.1} parent=1 // pred_check
      _
    $region3: #{tpu_custom_call.1} parent=1 // pred_check_branch
      %14 = sbr.rel (0) target = $region5
    $region4: #{tpu_custom_call.1} parent=1 // pred_region
      %s16 = ssub.s32 128, 128
      %17 = vsyncadd [#allocation3], %s16
      %s19 = sshll.u32 [#allocation2], 4
      %s20 = int_to_ptr.vmem [resolvable:$true] %s19
      %22 = dma.hbm_to_vmem [thread:$0]  %s0, 128, %s20, [#allocation3]
    $region5: #{tpu_custom_call.1} parent=1 // pred_fallthru
      _
    // Predicated region
    $region6: #{tpu_custom_call.1} parent=1 // pred_check
      _
    $region7: #{tpu_custom_call.1} parent=1 // pred_check_branch
      %24 = sbr.rel (0) target = $region9
    $region8: #{tpu_custom_call.1} parent=1 // pred_region
      %s26 = ssub.s32 128, 128
      %27 = vsyncadd [#allocation6], %s26
      %s28 = sshll.u32 [#allocation5], 4
      %s29 = int_to_ptr.vmem [resolvable:$true] %s28
      %34 = dma.hbm_to_vmem [thread:$0]  %s1, 128, %s29, [#allocation6], 64, 64, 4
    $region9: #{tpu_custom_call.1} parent=1 // pred_fallthru
      _
    // Predicated region
    $region10: #{tpu_custom_call.1} parent=1 // pred_check
      _
    $region11: #{tpu_custom_call.1} parent=1 // pred_check_branch
      %36 = sbr.rel (0) target = $region13
    $region12: #{tpu_custom_call.1} parent=1 // pred_region
      _
    $region13: #{tpu_custom_call.1} parent=1 // pred_fallthru
      _
    // Predicated region
    $region14: #{tpu_custom_call.1} parent=1 // pred_check
      _
    $region15: #{tpu_custom_call.1} parent=1 // pred_check_branch
      %38 = sbr.rel (0) target = $region17
    $region16: #{tpu_custom_call.1} parent=1 // pred_region
      %s40 = ssub.s32 1024, 1024
      %41 = vsyncadd [#allocation6], %s40
      %s42 = sshll.u32 [#allocation7], 4
      %s43 = int_to_ptr.vmem [resolvable:$true] %s42
      %48 = dma.hbm_to_vmem [thread:$0]  %s3, 1024, %s43, [#allocation6], 64, 64, 4
    $region17: #{tpu_custom_call.1} parent=1 // pred_fallthru
      _
    // Predicated region
    $region18: #{tpu_custom_call.1} parent=1 // pred_check
      _
    $region19: #{tpu_custom_call.1} parent=1 // pred_check_branch
      %50 = sbr.rel (0) target = $region21
    $region20: #{tpu_custom_call.1} parent=1 // pred_region
      _
    $region21: #{tpu_custom_call.1} parent=1 // pred_fallthru
      _
    // Predicated region
    $region22: #{tpu_custom_call.1} parent=1 // pred_check
      _
    $region23: #{tpu_custom_call.1} parent=1 // pred_check_branch
      %52 = sbr.rel (0) target = $region25
    $region24: #{tpu_custom_call.1} parent=1 // pred_region
      %53 = dma.done [#allocation3], 128
    $region25: #{tpu_custom_call.1} parent=1 // pred_fallthru
      _
    // Predicated region
    $region26: #{tpu_custom_call.1} parent=1 // pred_check
      _
    $region27: #{tpu_custom_call.1} parent=1 // pred_check_branch
      %55 = sbr.rel (0) target = $region29
    $region28: #{tpu_custom_call.1} parent=1 // pred_region
      %56 = dma.done [#allocation6], 128
    $region29: #{tpu_custom_call.1} parent=1 // pred_fallthru
      _
    // Predicated region
    $region30: #{tpu_custom_call.1} parent=1 // pred_check
      _
    $region31: #{tpu_custom_call.1} parent=1 // pred_check_branch
      %58 = sbr.rel (0) target = $region33
    $region32: #{tpu_custom_call.1} parent=1 // pred_region
      %59 = dma.done [#allocation6], 1024
    $region33: #{tpu_custom_call.1} parent=1 // pred_fallthru
      _
    %v61 = vld [vmem:[#allocation2] sm:$0xff]
    %v62 = vpack.c.bf16 %v61, %v61
    %v63 = vld [vmem:[#allocation5] sm:$0xf]
    %v64 = vld [vmem:[#allocation5 + $0x4] sm:$0xf]
    %v65 = vld [vmem:[%s2] sm:$0x1]
    %v67 = vlaneseq
    %v68 = vshrl.u32 %v67, 7
    %v69 = vsub.s32 0, %v68
    %v70 = vrot.slane %v65, %v69
    %v74 = vunpack.c.l.b16 %v63
    %v75 = vunpack.c.l.b16 %v64
    %v76 = vpack.c.b16 %v75, %v74
    %vm78 = vcmask 130048
    %v80 = vsel %vm78, %v62, 0
    %82 = vmatprep.subr.bf16.mxu0 0
    %83 = vmatpush1.bf16.msra.mxu0 %v76
    %84 = vmatprep.subr.bf16.mxu0 0
    %85 = vmatpush1.bf16.msra.mxu0 0
    %86 = vmatprep.subr.bf16.mxu0 0
    %87 = vmatpush1.bf16.msra.mxu0 0
    %88 = vmatprep.subr.bf16.mxu0 0
    %89 = vmatpush1.bf16.msra.mxu0 0
    %90 = vmatprep.subr.bf16.mxu0 0
    %91 = vmatpush1.bf16.msra.mxu0 0
    %92 = vmatprep.subr.bf16.mxu0 0
    %93 = vmatpush1.bf16.msra.mxu0 0
    %94 = vmatprep.subr.bf16.mxu0 0
    %95 = vmatpush1.bf16.msra.mxu0 0
    %96 = vmatprep.subr.bf16.mxu0 0
    %97 = vmatpush1.bf16.msra.mxu0 0
    %98 = vmatprep.subr.bf16.mxu0 0
    %99 = vmatpush1.bf16.msra.mxu0 0
    %100 = vmatprep.subr.bf16.mxu0 0
    %101 = vmatpush1.bf16.msra.mxu0 0
    %102 = vmatprep.subr.bf16.mxu0 0
    %103 = vmatpush1.bf16.msra.mxu0 0
    %104 = vmatprep.subr.bf16.mxu0 0
    %105 = vmatpush1.bf16.msra.mxu0 0
    %106 = vmatprep.subr.bf16.mxu0 0
    %107 = vmatpush1.bf16.msra.mxu0 0
    %108 = vmatprep.subr.bf16.mxu0 0
    %109 = vmatpush1.bf16.msra.mxu0 0
    %110 = vmatprep.subr.bf16.mxu0 0
    %111 = vmatpush1.bf16.msra.mxu0 0
    %112 = vmatprep.subr.bf16.mxu0 0
    %113 = vmatpush1.bf16.msra.mxu0 0
    %114 = vmatprep.mubr.bf16.mxu0 0
    %115 = vmatmul.mubr.bf16.gmra.mrb[0].mxu0 %v80
    %v116 = vpop.f32.mrb[0].mxu0
    %v117 = vadd.f32 %v70, %v116
    %v118 = vpop.f32.mrb[0].mxu0
    %v119 = vpop.f32.mrb[0].mxu0
    %v120 = vpop.f32.mrb[0].mxu0
    %121 = vdwg.mxu0
    %v122 = vmax.f32 %v117, 0.0
    %v123 = vpack.c.bf16 %v122, %v122
    %v124 = vld [vmem:[#allocation7] sm:$0xf]
    %v125 = vld [vmem:[#allocation7 + $0x4] sm:$0xf]
    %v126 = vld [vmem:[#allocation7 + $0x8] sm:$0xf]
    %v127 = vld [vmem:[#allocation7 + $0xc] sm:$0xf]
    %v128 = vld [vmem:[#allocation7 + $0x10] sm:$0xf]
    %v129 = vld [vmem:[#allocation7 + $0x14] sm:$0xf]
    %v130 = vld [vmem:[#allocation7 + $0x18] sm:$0xf]
    %v131 = vld [vmem:[#allocation7 + $0x1c] sm:$0xf]
    %v132 = vld [vmem:[#allocation7 + $0x20] sm:$0xf]
    %v133 = vld [vmem:[#allocation7 + $0x24] sm:$0xf]
    %v134 = vld [vmem:[#allocation7 + $0x28] sm:$0xf]
    %v135 = vld [vmem:[#allocation7 + $0x2c] sm:$0xf]
    %v136 = vld [vmem:[#allocation7 + $0x30] sm:$0xf]
    %v137 = vld [vmem:[#allocation7 + $0x34] sm:$0xf]
    %v138 = vld [vmem:[#allocation7 + $0x38] sm:$0xf]
    %v139 = vld [vmem:[#allocation7 + $0x3c] sm:$0xf]
    %v140 = vld [vmem:[%s4] sm:$0x1]
    %v142 = vlaneseq
    %v143 = vshrl.u32 %v142, 7
    %v144 = vsub.s32 0, %v143
    %v145 = vrot.slane %v140, %v144
    %v163 = vunpack.c.l.b16 %v124
    %v164 = vunpack.c.l.b16 %v125
    %v165 = vunpack.c.l.b16 %v126
    %v166 = vunpack.c.l.b16 %v127
    %v167 = vunpack.c.l.b16 %v128
    %v168 = vunpack.c.l.b16 %v129
    %v169 = vunpack.c.l.b16 %v130
    %v170 = vunpack.c.l.b16 %v131
    %v171 = vunpack.c.l.b16 %v132
    %v172 = vunpack.c.l.b16 %v133
    %v173 = vunpack.c.l.b16 %v134
    %v174 = vunpack.c.l.b16 %v135
    %v175 = vunpack.c.l.b16 %v136
    %v176 = vunpack.c.l.b16 %v137
    %v177 = vunpack.c.l.b16 %v138
    %v178 = vunpack.c.l.b16 %v139
    %v179 = vpack.c.b16 %v164, %v163
    %v180 = vpack.c.b16 %v166, %v165
    %v181 = vpack.c.b16 %v168, %v167
    %v182 = vpack.c.b16 %v170, %v169
    %v183 = vpack.c.b16 %v172, %v171
    %v184 = vpack.c.b16 %v174, %v173
    %v185 = vpack.c.b16 %v176, %v175
    %v186 = vpack.c.b16 %v178, %v177
    %195 = vmatprep.subr.bf16.mxu0 0
    %196 = vmatpush1.bf16.msra.mxu0 %v179
    %197 = vmatprep.subr.bf16.mxu0 0
    %198 = vmatpush1.bf16.msra.mxu0 %v180
    %199 = vmatprep.subr.bf16.mxu0 0
    %200 = vmatpush1.bf16.msra.mxu0 %v181
    %201 = vmatprep.subr.bf16.mxu0 0
    %202 = vmatpush1.bf16.msra.mxu0 %v182
    %203 = vmatprep.subr.bf16.mxu0 0
    %204 = vmatpush1.bf16.msra.mxu0 %v183
    %205 = vmatprep.subr.bf16.mxu0 0
    %206 = vmatpush1.bf16.msra.mxu0 %v184
    %207 = vmatprep.subr.bf16.mxu0 0
    %208 = vmatpush1.bf16.msra.mxu0 %v185
    %209 = vmatprep.subr.bf16.mxu0 0
    %210 = vmatpush1.bf16.msra.mxu0 %v186
    %211 = vmatprep.subr.bf16.mxu0 0
    %212 = vmatpush1.bf16.msra.mxu0 0
    %213 = vmatprep.subr.bf16.mxu0 0
    %214 = vmatpush1.bf16.msra.mxu0 0
    %215 = vmatprep.subr.bf16.mxu0 0
    %216 = vmatpush1.bf16.msra.mxu0 0
    %217 = vmatprep.subr.bf16.mxu0 0
    %218 = vmatpush1.bf16.msra.mxu0 0
    %219 = vmatprep.subr.bf16.mxu0 0
    %220 = vmatpush1.bf16.msra.mxu0 0
    %221 = vmatprep.subr.bf16.mxu0 0
    %222 = vmatpush1.bf16.msra.mxu0 0
    %223 = vmatprep.subr.bf16.mxu0 0
    %224 = vmatpush1.bf16.msra.mxu0 0
    %225 = vmatprep.subr.bf16.mxu0 0
    %226 = vmatpush1.bf16.msra.mxu0 0
    %227 = vmatprep.mubr.bf16.mxu0 0
    %228 = vmatmul.mubr.bf16.gmra.mrb[0].mxu0 %v123
    %v229 = vpop.f32.mrb[0].mxu0
    %v230 = vadd.f32 %v145, %v229
    %v231 = vpop.f32.mrb[0].mxu0
    %v232 = vpop.f32.mrb[0].mxu0
    %v233 = vpop.f32.mrb[0].mxu0
    %234 = vdwg.mxu0
    %v235 = vmax.f32 %v230, 0.0
    %v236 = vpack.c.bf16 %v235, %v235
    %237 = vst [vmem:[#allocation8] sm:$0xf] %v236
    // Predicated region
    $region34: #{tpu_custom_call.1} parent=1 // pred_check
      _
    $region35: #{tpu_custom_call.1} parent=1 // pred_check_branch
      %239 = sbr.rel (0) target = $region37
    $region36: #{tpu_custom_call.1} parent=1 // pred_region
      %s241 = ssub.s32 64, 64
      %242 = vsyncadd [#allocation4], %s241
      %s244 = sshll.u32 [#allocation8], 4
      %s245 = int_to_ptr.vmem [resolvable:$true] %s244
      %247 = dma.vmem_to_hbm [thread:$0]  %s245, 64, %s5, [#allocation4]
    $region37: #{tpu_custom_call.1} parent=1 // pred_fallthru
      _
    // Predicated region
    $region38: #{tpu_custom_call.1} parent=1 // pred_check
      _
    $region39: #{tpu_custom_call.1} parent=1 // pred_check_branch
      %249 = sbr.rel (0) target = $region41
    $region40: #{tpu_custom_call.1} parent=1 // pred_region
      %250 = dma.done [#allocation4], 64
    $region41: #{tpu_custom_call.1} parent=1 // pred_fallthru
      _
    %251 = vsyncpa [#allocation3], 1
    %252 = vsyncpa [#allocation6], 1
    %253 = vsyncpa [#allocation4], 1

</llo_original>
